<compile_context>
chip_gen: v7x
topology: tpu7x:2x2x1
jax: 0.10.0
libtpu: 0.0.40
codegen_flags: <defaults>
</compile_context>

<pallas_src>
import functools

import jax
import jax.numpy as jnp
from jax.experimental import pallas as pl
from jax.experimental.pallas import tpu as pltpu

STATE_SIZE = 16
ACTION_SIZE = 6
HIDDEN = 64

# Lane-dense padded widths.
HIDDEN_P = 128
OUT_P = 128

# Default max batch tile (rows per grid step). Kept modest so the double-buffered
# x/out tiles comfortably fit the v7x 64 MiB VMEM alongside the resident weights.
DEFAULT_TB = 512


def _round_up(n, m):
    return ((n + m - 1) // m) * m


def qnetwork_kernel(x_ref, w1_ref, b1_ref, w2_ref, b2_ref, w3_ref, b3_ref, o_ref):
    # fc1 + ReLU  (bf16 operands, f32 accumulation; bias/ReLU in f32)
    h1 = jnp.dot(x_ref[...], w1_ref[...], preferred_element_type=jnp.float32) + b1_ref[...]
    h1 = jnp.maximum(h1, 0.0).astype(jnp.bfloat16)
    # fc2 + ReLU
    h2 = jnp.dot(h1, w2_ref[...], preferred_element_type=jnp.float32) + b2_ref[...]
    h2 = jnp.maximum(h2, 0.0).astype(jnp.bfloat16)
    # fc3 (no activation) — lane-dense 128-wide store; padded columns are exactly 0.
    o_ref[...] = (jnp.dot(h2, w3_ref[...], preferred_element_type=jnp.float32)
                  + b3_ref[...]).astype(o_ref.dtype)


def prepare_params(params):
    """Zero-pad hidden/output widths to 128 lanes and cast weights to bf16 (biases stay f32)."""
    def pad2(a, rows, cols):
        return jnp.pad(a, ((0, rows - a.shape[0]), (0, cols - a.shape[1])))

    w1 = pad2(params["w1"], STATE_SIZE, HIDDEN_P).astype(jnp.bfloat16)   # (16, 128)
    b1 = pad2(params["b1"], 1, HIDDEN_P).astype(jnp.float32)             # (1, 128)
    w2 = pad2(params["w2"], HIDDEN_P, HIDDEN_P).astype(jnp.bfloat16)     # (128, 128)
    b2 = pad2(params["b2"], 1, HIDDEN_P).astype(jnp.float32)             # (1, 128)
    w3 = pad2(params["w3"], HIDDEN_P, OUT_P).astype(jnp.bfloat16)        # (128, 128)
    b3 = pad2(params["b3"], 1, OUT_P).astype(jnp.float32)                # (1, 128)
    return w1, b1, w2, b2, w3, b3


@functools.partial(jax.jit, static_argnames=("tb",))
def qnetwork_forward(x, params, tb=DEFAULT_TB):
    """x: (B, STATE_SIZE) float32; params: dict of unpadded weights/biases. Returns (B, ACTION_SIZE) f32."""
    B = x.shape[0]
    w1, b1, w2, b2, w3, b3 = prepare_params(params)

    # Pick a sublane-aligned batch tile and pad the batch to a multiple of it.
    TB = min(tb, _round_up(B, 8))
    Bp = _round_up(B, TB)
    x_p = jnp.pad(x, ((0, Bp - B), (0, 0))).astype(jnp.bfloat16)

    grid = (Bp // TB,)

    # x / out tiles move with the grid step; weights & biases are constant-indexed
    # (VMEM-resident across all steps, no re-DMA).
    x_spec = pl.BlockSpec((TB, STATE_SIZE), lambda i: (i, 0))
    out_spec = pl.BlockSpec((TB, OUT_P), lambda i: (i, 0))
    const = lambda shape: pl.BlockSpec(shape, lambda i: (0, 0))

    weight_bytes = (w1.size + w2.size + w3.size) * 2 + (b1.size + b2.size + b3.size) * 4
    cost = pl.CostEstimate(
        flops=2 * Bp * (STATE_SIZE * HIDDEN_P + HIDDEN_P * HIDDEN_P + HIDDEN_P * OUT_P),
        transcendentals=0,
        bytes_accessed=Bp * STATE_SIZE * 2 + Bp * OUT_P * 4 + weight_bytes,
    )

    out_padded = pl.pallas_call(
        qnetwork_kernel,
        out_shape=jax.ShapeDtypeStruct((Bp, OUT_P), jnp.float32),
        grid=grid,
        in_specs=[
            x_spec,
            const((STATE_SIZE, HIDDEN_P)), const((1, HIDDEN_P)),
            const((HIDDEN_P, HIDDEN_P)), const((1, HIDDEN_P)),
            const((HIDDEN_P, OUT_P)), const((1, OUT_P)),
        ],
        out_specs=out_spec,
        compiler_params=pltpu.CompilerParams(dimension_semantics=("parallel",)),
        cost_estimate=cost,
    )(x_p, w1, b1, w2, b2, w3, b3)

    return out_padded[:B, :ACTION_SIZE]


def init_params(key):
    """Deterministic init mimicking PyTorch nn.Linear default: U(-1/sqrt(fan_in), 1/sqrt(fan_in)).
    Weights stored as (in, out) so x @ W + b == PyTorch's x @ W.T + b."""
    def linear_init(key, fan_in, fan_out):
        kw, kb = jax.random.split(key)
        bound = 1.0 / jnp.sqrt(fan_in)
        w = jax.random.uniform(kw, (fan_in, fan_out), jnp.float32, -bound, bound)
        b = jax.random.uniform(kb, (1, fan_out), jnp.float32, -bound, bound)
        return w, b

    k1, k2, k3 = jax.random.split(key, 3)
    w1, b1 = linear_init(k1, STATE_SIZE, HIDDEN)
    w2, b2 = linear_init(k2, HIDDEN, HIDDEN)
    w3, b3 = linear_init(k3, HIDDEN, ACTION_SIZE)
    return {"w1": w1, "b1": b1, "w2": w2, "b2": b2, "w3": w3, "b3": b3}


def reference_forward_bf16(x, params):
    """Pure-JAX reference using the same bf16-operand / f32-accumulation recipe as the kernel."""
    xb = x.astype(jnp.bfloat16)
    h1 = jnp.dot(xb, params["w1"].astype(jnp.bfloat16),
                 preferred_element_type=jnp.float32) + params["b1"]
    h1 = jnp.maximum(h1, 0.0).astype(jnp.bfloat16)
    h2 = jnp.dot(h1, params["w2"].astype(jnp.bfloat16),
                 preferred_element_type=jnp.float32) + params["b2"]
    h2 = jnp.maximum(h2, 0.0).astype(jnp.bfloat16)
    return jnp.dot(h2, params["w3"].astype(jnp.bfloat16),
                   preferred_element_type=jnp.float32) + params["b3"]


def reference_forward_f32(x, params):
    h1 = jnp.maximum(x @ params["w1"] + params["b1"], 0.0)
    h2 = jnp.maximum(h1 @ params["w2"] + params["b2"], 0.0)
    return h2 @ params["w3"] + params["b3"]


if __name__ == "__main__":
    key = jax.random.PRNGKey(0)
    k_params, k_x = jax.random.split(key)

    params = init_params(k_params)
    batch = 2
    x = jax.random.normal(k_x, (batch, STATE_SIZE), jnp.float32)

    out = qnetwork_forward(x, params)
    out = jax.block_until_ready(out)

    assert out.shape == (batch, ACTION_SIZE), out.shape

    ref_bf16 = reference_forward_bf16(x, params)
    ref_f32 = reference_forward_f32(x, params)
    assert jnp.allclose(out, ref_bf16, atol=1e-3, rtol=1e-3), (out, ref_bf16)
    assert jnp.allclose(out, ref_f32, atol=5e-2, rtol=5e-2), (out, ref_f32)

    print("KERNEL_OK")
</pallas_src>

<mosaic_0001>
module attributes {stable_mosaic.version = 11 : i64} {
  func.func @qnetwork_kernel(%arg0: i32, %arg1: memref<8x16xbf16, #tpu.memory_space<vmem>>, %arg2: memref<16x128xbf16, #tpu.memory_space<vmem>>, %arg3: memref<1x128xf32, #tpu.memory_space<vmem>>, %arg4: memref<128x128xbf16, #tpu.memory_space<vmem>>, %arg5: memref<1x128xf32, #tpu.memory_space<vmem>>, %arg6: memref<128x128xbf16, #tpu.memory_space<vmem>>, %arg7: memref<1x128xf32, #tpu.memory_space<vmem>>, %arg8: memref<8x128xf32, #tpu.memory_space<vmem>>) attributes {dimension_semantics = [#tpu.dimension_semantics<parallel>], iteration_bounds = array<i64: 1>, scalar_prefetch = 0 : i64, scratch_operands = 0 : i64, tpu.core_type = #tpu.core_type<tc>, window_params = [{transform_indices = @transform_0, window_bounds = array<i64: 8, 16>}, {pipeline_mode = #tpu.pipeline_mode<synchronous>, transform_indices = @transform_1, window_bounds = array<i64: 16, 128>}, {pipeline_mode = #tpu.pipeline_mode<synchronous>, transform_indices = @transform_2, window_bounds = array<i64: 1, 128>}, {pipeline_mode = #tpu.pipeline_mode<synchronous>, transform_indices = @transform_3, window_bounds = array<i64: 128, 128>}, {pipeline_mode = #tpu.pipeline_mode<synchronous>, transform_indices = @transform_4, window_bounds = array<i64: 1, 128>}, {pipeline_mode = #tpu.pipeline_mode<synchronous>, transform_indices = @transform_5, window_bounds = array<i64: 128, 128>}, {pipeline_mode = #tpu.pipeline_mode<synchronous>, transform_indices = @transform_6, window_bounds = array<i64: 1, 128>}, {transform_indices = @transform_7, window_bounds = array<i64: 8, 128>}]} {
    %c0 = arith.constant 0 : index
    %c0_0 = arith.constant 0 : index
    %0 = vector.load %arg1[%c0, %c0_0] : memref<8x16xbf16, #tpu.memory_space<vmem>>, vector<8x16xbf16>
    %c0_1 = arith.constant 0 : index
    %c0_2 = arith.constant 0 : index
    %1 = vector.load %arg2[%c0_1, %c0_2] : memref<16x128xbf16, #tpu.memory_space<vmem>>, vector<16x128xbf16>
    %cst = arith.constant dense<0.000000e+00> : vector<8x128xf32>
    %2 = tpu.matmul %0, %1, %cst {dimension_numbers = #tpu.dot_dimension_numbers<[1], [0], [0], [1], [0, 0, 1, 1], [], []>} : vector<8x16xbf16>, vector<16x128xbf16>, vector<8x128xf32> -> vector<8x128xf32>
    %c0_3 = arith.constant 0 : index
    %c0_4 = arith.constant 0 : index
    %3 = vector.load %arg3[%c0_3, %c0_4] : memref<1x128xf32, #tpu.memory_space<vmem>>, vector<1x128xf32>
    %4 = vector.broadcast %3 : vector<1x128xf32> to vector<8x128xf32>
    %5 = arith.addf %2, %4 : vector<8x128xf32>
    %cst_5 = arith.constant 0.000000e+00 : f32
    %6 = vector.broadcast %cst_5 : f32 to vector<8x128xf32>
    %7 = arith.maximumf %5, %6 : vector<8x128xf32>
    %8 = arith.truncf %7 : vector<8x128xf32> to vector<8x128xbf16>
    %c0_6 = arith.constant 0 : index
    %c0_7 = arith.constant 0 : index
    %9 = vector.load %arg4[%c0_6, %c0_7] : memref<128x128xbf16, #tpu.memory_space<vmem>>, vector<128x128xbf16>
    %cst_8 = arith.constant dense<0.000000e+00> : vector<8x128xf32>
    %10 = tpu.matmul %8, %9, %cst_8 {dimension_numbers = #tpu.dot_dimension_numbers<[1], [0], [0], [1], [0, 0, 1, 1], [], []>} : vector<8x128xbf16>, vector<128x128xbf16>, vector<8x128xf32> -> vector<8x128xf32>
    %c0_9 = arith.constant 0 : index
    %c0_10 = arith.constant 0 : index
    %11 = vector.load %arg5[%c0_9, %c0_10] : memref<1x128xf32, #tpu.memory_space<vmem>>, vector<1x128xf32>
    %12 = vector.broadcast %11 : vector<1x128xf32> to vector<8x128xf32>
    %13 = arith.addf %10, %12 : vector<8x128xf32>
    %cst_11 = arith.constant 0.000000e+00 : f32
    %14 = vector.broadcast %cst_11 : f32 to vector<8x128xf32>
    %15 = arith.maximumf %13, %14 : vector<8x128xf32>
    %16 = arith.truncf %15 : vector<8x128xf32> to vector<8x128xbf16>
    %c0_12 = arith.constant 0 : index
    %c0_13 = arith.constant 0 : index
    %17 = vector.load %arg6[%c0_12, %c0_13] : memref<128x128xbf16, #tpu.memory_space<vmem>>, vector<128x128xbf16>
    %cst_14 = arith.constant dense<0.000000e+00> : vector<8x128xf32>
    %18 = tpu.matmul %16, %17, %cst_14 {dimension_numbers = #tpu.dot_dimension_numbers<[1], [0], [0], [1], [0, 0, 1, 1], [], []>} : vector<8x128xbf16>, vector<128x128xbf16>, vector<8x128xf32> -> vector<8x128xf32>
    %c0_15 = arith.constant 0 : index
    %c0_16 = arith.constant 0 : index
    %19 = vector.load %arg7[%c0_15, %c0_16] : memref<1x128xf32, #tpu.memory_space<vmem>>, vector<1x128xf32>
    %20 = vector.broadcast %19 : vector<1x128xf32> to vector<8x128xf32>
    %21 = arith.addf %18, %20 : vector<8x128xf32>
    %c0_17 = arith.constant 0 : index
    %c0_18 = arith.constant 0 : index
    %22 = vector.load %arg8[%c0_17, %c0_18] : memref<8x128xf32, #tpu.memory_space<vmem>>, vector<8x128xf32>
    tpu.vector_store %arg8[%c0_17, %c0_18], %21 {strides = array<i32>} : memref<8x128xf32, #tpu.memory_space<vmem>>, vector<8x128xf32>,
    return
  }
  func.func @transform_0(%arg0: i32) -> (i32, i32) {
    %c0_i32 = arith.constant 0 : i32
    %c0_i32_0 = arith.constant 0 : i32
    return %arg0, %c0_i32 : i32, i32
  }
  func.func @transform_1(%arg0: i32) -> (i32, i32) {
    %c0_i32 = arith.constant 0 : i32
    %c0_i32_0 = arith.constant 0 : i32
    %c0_i32_1 = arith.constant 0 : i32
    return %c0_i32, %c0_i32_0 : i32, i32
  }
  func.func @transform_2(%arg0: i32) -> (i32, i32) {
    %c0_i32 = arith.constant 0 : i32
    %c0_i32_0 = arith.constant 0 : i32
    %c0_i32_1 = arith.constant 0 : i32
    return %c0_i32, %c0_i32_0 : i32, i32
  }
  func.func @transform_3(%arg0: i32) -> (i32, i32) {
    %c0_i32 = arith.constant 0 : i32
    %c0_i32_0 = arith.constant 0 : i32
    %c0_i32_1 = arith.constant 0 : i32
    return %c0_i32, %c0_i32_0 : i32, i32
  }
  func.func @transform_4(%arg0: i32) -> (i32, i32) {
    %c0_i32 = arith.constant 0 : i32
    %c0_i32_0 = arith.constant 0 : i32
    %c0_i32_1 = arith.constant 0 : i32
    return %c0_i32, %c0_i32_0 : i32, i32
  }
  func.func @transform_5(%arg0: i32) -> (i32, i32) {
    %c0_i32 = arith.constant 0 : i32
    %c0_i32_0 = arith.constant 0 : i32
    %c0_i32_1 = arith.constant 0 : i32
    return %c0_i32, %c0_i32_0 : i32, i32
  }
  func.func @transform_6(%arg0: i32) -> (i32, i32) {
    %c0_i32 = arith.constant 0 : i32
    %c0_i32_0 = arith.constant 0 : i32
    %c0_i32_1 = arith.constant 0 : i32
    return %c0_i32, %c0_i32_0 : i32, i32
  }
  func.func @transform_7(%arg0: i32) -> (i32, i32) {
    %c0_i32 = arith.constant 0 : i32
    %c0_i32_0 = arith.constant 0 : i32
    return %arg0, %c0_i32 : i32, i32
  }
}

</mosaic_0001>

<llo_original>
// kernel: qnetwork_forward.1
$region0: #{qnetwork_forward.1}
  #allocation0 [shape = 'u32[]', space=smem, size = 0x4, offset = 0x4, fixed_abs, tag = 'smem constant byte address 0x4 - core index']
  #allocation1 [shape = 'u32[144,128]{1,0:T(1,128)}', space=vmem, size = 0x12000, scoped, tag = 'internal scratch']
  %s0 = inlined_call_operand.vmem [shape: bf16[8,16], index: 0, kind: input, shape index: {}]
  %s1 = inlined_call_operand.vmem [shape: bf16[16,128], index: 1, kind: input, shape index: {}]
  %s2 = inlined_call_operand.vmem [shape: f32[1,128], index: 2, kind: input, shape index: {}]
  %s3 = inlined_call_operand.vmem [shape: bf16[128,128], index: 3, kind: input, shape index: {}]
  %s4 = inlined_call_operand.vmem [shape: f32[1,128], index: 4, kind: input, shape index: {}]
  %s5 = inlined_call_operand.vmem [shape: bf16[128,128], index: 5, kind: input, shape index: {}]
  %s6 = inlined_call_operand.vmem [shape: f32[1,128], index: 6, kind: input, shape index: {}]
  %s7 = inlined_call_operand.vmem [shape: f32[8,128], index: 7, kind: output, shape index: {}]
  %s8 = sld [smem:[#allocation0]]
  $region38: #{qnetwork_forward.1} parent=0
    _
  %s10 = ssub.s32 1, %s8
  %s11 = scalar_select 0, %s10, %s8
  // Predicated region
  $region2: #{qnetwork_forward.1} parent=0 // pred_check
    _
  $region3: #{qnetwork_forward.1} parent=0 // pred_check_branch
    %13 = sbr.rel (0) target = $region5
  $region4: #{qnetwork_forward.1} parent=0 // pred_region
    _
  $region5: #{qnetwork_forward.1} parent=0 // pred_fallthru
    _
  // Predicated region
  $region6: #{qnetwork_forward.1} parent=0 // pred_check
    _
  $region7: #{qnetwork_forward.1} parent=0 // pred_check_branch
    %15 = sbr.rel (0) target = $region9
  $region8: #{qnetwork_forward.1} parent=0 // pred_region
    _
  $region9: #{qnetwork_forward.1} parent=0 // pred_fallthru
    _
  // Predicated region
  $region10: #{qnetwork_forward.1} parent=0 // pred_check
    _
  $region11: #{qnetwork_forward.1} parent=0 // pred_check_branch
    %17 = sbr.rel (0) target = $region13
  $region12: #{qnetwork_forward.1} parent=0 // pred_region
    _
  $region13: #{qnetwork_forward.1} parent=0 // pred_fallthru
    _
  // Predicated region
  $region14: #{qnetwork_forward.1} parent=0 // pred_check
    _
  $region15: #{qnetwork_forward.1} parent=0 // pred_check_branch
    %19 = sbr.rel (0) target = $region17
  $region16: #{qnetwork_forward.1} parent=0 // pred_region
    _
  $region17: #{qnetwork_forward.1} parent=0 // pred_fallthru
    _
  // Predicated region
  $region18: #{qnetwork_forward.1} parent=0 // pred_check
    _
  $region19: #{qnetwork_forward.1} parent=0 // pred_check_branch
    %21 = sbr.rel (0) target = $region21
  $region20: #{qnetwork_forward.1} parent=0 // pred_region
    _
  $region21: #{qnetwork_forward.1} parent=0 // pred_fallthru
    _
  // Predicated region
  $region22: #{qnetwork_forward.1} parent=0 // pred_check
    _
  $region23: #{qnetwork_forward.1} parent=0 // pred_check_branch
    %23 = sbr.rel (0) target = $region25
  $region24: #{qnetwork_forward.1} parent=0 // pred_region
    _
  $region25: #{qnetwork_forward.1} parent=0 // pred_fallthru
    _
  // Predicated region
  $region26: #{qnetwork_forward.1} parent=0 // pred_check
    _
  $region27: #{qnetwork_forward.1} parent=0 // pred_check_branch
    %25 = sbr.rel (0) target = $region29
  $region28: #{qnetwork_forward.1} parent=0 // pred_region
    _
  $region29: #{qnetwork_forward.1} parent=0 // pred_fallthru
    _
  %v27 = vld [vmem:[%s0] sm:$0xf]
  %v28 = vld [vmem:[%s1] sm:$0xf]
  %v29 = vld [vmem:[%s1 + $0x4] sm:$0xf]
  %v30 = vld [vmem:[%s2] sm:$0x1]
  %v32 = vlaneseq
  %v33 = vshrl.u32 %v32, 7
  %v34 = vsub.s32 0, %v33
  %v35 = vrot.slane %v30, %v34
  %v39 = vunpack.c.l.b16 %v28
  %v40 = vunpack.c.l.b16 %v29
  %v41 = vpack.c.b16 %v40, %v39
  %vm43 = vcmask 130048
  %v45 = vsel %vm43, %v27, 0
  %47 = vmatprep.subr.bf16.mxu0 0
  %48 = vmatpush1.bf16.msra.mxu0 %v41
  %49 = vmatprep.subr.bf16.mxu0 0
  %50 = vmatpush1.bf16.msra.mxu0 0
  %51 = vmatprep.subr.bf16.mxu0 0
  %52 = vmatpush1.bf16.msra.mxu0 0
  %53 = vmatprep.subr.bf16.mxu0 0
  %54 = vmatpush1.bf16.msra.mxu0 0
  %55 = vmatprep.subr.bf16.mxu0 0
  %56 = vmatpush1.bf16.msra.mxu0 0
  %57 = vmatprep.subr.bf16.mxu0 0
  %58 = vmatpush1.bf16.msra.mxu0 0
  %59 = vmatprep.subr.bf16.mxu0 0
  %60 = vmatpush1.bf16.msra.mxu0 0
  %61 = vmatprep.subr.bf16.mxu0 0
  %62 = vmatpush1.bf16.msra.mxu0 0
  %63 = vmatprep.subr.bf16.mxu0 0
  %64 = vmatpush1.bf16.msra.mxu0 0
  %65 = vmatprep.subr.bf16.mxu0 0
  %66 = vmatpush1.bf16.msra.mxu0 0
  %67 = vmatprep.subr.bf16.mxu0 0
  %68 = vmatpush1.bf16.msra.mxu0 0
  %69 = vmatprep.subr.bf16.mxu0 0
  %70 = vmatpush1.bf16.msra.mxu0 0
  %71 = vmatprep.subr.bf16.mxu0 0
  %72 = vmatpush1.bf16.msra.mxu0 0
  %73 = vmatprep.subr.bf16.mxu0 0
  %74 = vmatpush1.bf16.msra.mxu0 0
  %75 = vmatprep.subr.bf16.mxu0 0
  %76 = vmatpush1.bf16.msra.mxu0 0
  %77 = vmatprep.subr.bf16.mxu0 0
  %78 = vmatpush1.bf16.msra.mxu0 0
  %79 = vmatprep.mubr.bf16.mxu0 0
  %80 = vmatmul.mubr.bf16.gmra.mrb[0].mxu0 %v45
  %v81 = vpop.f32.mrb[0].mxu0
  %v82 = vadd.f32 %v35, %v81
  %v83 = vpop.f32.mrb[0].mxu0
  %v84 = vpop.f32.mrb[0].mxu0
  %v85 = vpop.f32.mrb[0].mxu0
  %86 = vdwg.mxu0
  %v87 = vmax.f32 %v82, 0.0
  %v88 = vpack.c.bf16 %v87, %v87
  %v89 = vld [vmem:[%s3] sm:$0xf]
  %v90 = vld [vmem:[%s3 + $0x4] sm:$0xf]
  %v91 = vld [vmem:[%s3 + $0x8] sm:$0xf]
  %v92 = vld [vmem:[%s3 + $0xc] sm:$0xf]
  %v93 = vld [vmem:[%s3 + $0x10] sm:$0xf]
  %v94 = vld [vmem:[%s3 + $0x14] sm:$0xf]
  %v95 = vld [vmem:[%s3 + $0x18] sm:$0xf]
  %v96 = vld [vmem:[%s3 + $0x1c] sm:$0xf]
  %v97 = vld [vmem:[%s3 + $0x20] sm:$0xf]
  %v98 = vld [vmem:[%s3 + $0x24] sm:$0xf]
  %v99 = vld [vmem:[%s3 + $0x28] sm:$0xf]
  %v100 = vld [vmem:[%s3 + $0x2c] sm:$0xf]
  %v101 = vld [vmem:[%s3 + $0x30] sm:$0xf]
  %v102 = vld [vmem:[%s3 + $0x34] sm:$0xf]
  %v103 = vld [vmem:[%s3 + $0x38] sm:$0xf]
  %v104 = vld [vmem:[%s3 + $0x3c] sm:$0xf]
  %v105 = vld [vmem:[%s4] sm:$0x1]
  %v107 = vlaneseq
  %v108 = vshrl.u32 %v107, 7
  %v109 = vsub.s32 0, %v108
  %v110 = vrot.slane %v105, %v109
  %v128 = vunpack.c.l.b16 %v89
  %v129 = vunpack.c.l.b16 %v90
  %v130 = vunpack.c.l.b16 %v91
  %v131 = vunpack.c.l.b16 %v92
  %v132 = vunpack.c.l.b16 %v93
  %v133 = vunpack.c.l.b16 %v94
  %v134 = vunpack.c.l.b16 %v95
  %v135 = vunpack.c.l.b16 %v96
  %v136 = vunpack.c.l.b16 %v97
  %v137 = vunpack.c.l.b16 %v98
  %v138 = vunpack.c.l.b16 %v99
  %v139 = vunpack.c.l.b16 %v100
  %v140 = vunpack.c.l.b16 %v101
  %v141 = vunpack.c.l.b16 %v102
  %v142 = vunpack.c.l.b16 %v103
  %v143 = vunpack.c.l.b16 %v104
  %v144 = vpack.c.b16 %v129, %v128
  %v145 = vpack.c.b16 %v131, %v130
  %v146 = vpack.c.b16 %v133, %v132
  %v147 = vpack.c.b16 %v135, %v134
  %v148 = vpack.c.b16 %v137, %v136
  %v149 = vpack.c.b16 %v139, %v138
  %v150 = vpack.c.b16 %v141, %v140
  %v151 = vpack.c.b16 %v143, %v142
  %160 = vmatprep.subr.bf16.mxu0 0
  %161 = vmatpush1.bf16.msra.mxu0 %v144
  %162 = vmatprep.subr.bf16.mxu0 0
  %163 = vmatpush1.bf16.msra.mxu0 %v145
  %164 = vmatprep.subr.bf16.mxu0 0
  %165 = vmatpush1.bf16.msra.mxu0 %v146
  %166 = vmatprep.subr.bf16.mxu0 0
  %167 = vmatpush1.bf16.msra.mxu0 %v147
  %168 = vmatprep.subr.bf16.mxu0 0
  %169 = vmatpush1.bf16.msra.mxu0 %v148
  %170 = vmatprep.subr.bf16.mxu0 0
  %171 = vmatpush1.bf16.msra.mxu0 %v149
  %172 = vmatprep.subr.bf16.mxu0 0
  %173 = vmatpush1.bf16.msra.mxu0 %v150
  %174 = vmatprep.subr.bf16.mxu0 0
  %175 = vmatpush1.bf16.msra.mxu0 %v151
  %176 = vmatprep.subr.bf16.mxu0 0
  %177 = vmatpush1.bf16.msra.mxu0 0
  %178 = vmatprep.subr.bf16.mxu0 0
  %179 = vmatpush1.bf16.msra.mxu0 0
  %180 = vmatprep.subr.bf16.mxu0 0
  %181 = vmatpush1.bf16.msra.mxu0 0
  %182 = vmatprep.subr.bf16.mxu0 0
  %183 = vmatpush1.bf16.msra.mxu0 0
  %184 = vmatprep.subr.bf16.mxu0 0
  %185 = vmatpush1.bf16.msra.mxu0 0
  %186 = vmatprep.subr.bf16.mxu0 0
  %187 = vmatpush1.bf16.msra.mxu0 0
  %188 = vmatprep.subr.bf16.mxu0 0
  %189 = vmatpush1.bf16.msra.mxu0 0
  %190 = vmatprep.subr.bf16.mxu0 0
  %191 = vmatpush1.bf16.msra.mxu0 0
  %192 = vmatprep.mubr.bf16.mxu0 0
  %193 = vmatmul.mubr.bf16.gmra.mrb[0].mxu0 %v88
  %v194 = vpop.f32.mrb[0].mxu0
  %v195 = vadd.f32 %v110, %v194
  %v196 = vpop.f32.mrb[0].mxu0
  %v197 = vpop.f32.mrb[0].mxu0
  %v198 = vpop.f32.mrb[0].mxu0
  %199 = vdwg.mxu0
  %v200 = vmax.f32 %v195, 0.0
  %v201 = vpack.c.bf16 %v200, %v200
  %v202 = vld [vmem:[%s5] sm:$0xf]
  %v203 = vld [vmem:[%s5 + $0x4] sm:$0xf]
  %v204 = vld [vmem:[%s5 + $0x8] sm:$0xf]
  %v205 = vld [vmem:[%s5 + $0xc] sm:$0xf]
  %v206 = vld [vmem:[%s5 + $0x10] sm:$0xf]
  %v207 = vld [vmem:[%s5 + $0x14] sm:$0xf]
  %v208 = vld [vmem:[%s5 + $0x18] sm:$0xf]
  %v209 = vld [vmem:[%s5 + $0x1c] sm:$0xf]
  %v210 = vld [vmem:[%s5 + $0x20] sm:$0xf]
  %v211 = vld [vmem:[%s5 + $0x24] sm:$0xf]
  %v212 = vld [vmem:[%s5 + $0x28] sm:$0xf]
  %v213 = vld [vmem:[%s5 + $0x2c] sm:$0xf]
  %v214 = vld [vmem:[%s5 + $0x30] sm:$0xf]
  %v215 = vld [vmem:[%s5 + $0x34] sm:$0xf]
  %v216 = vld [vmem:[%s5 + $0x38] sm:$0xf]
  %v217 = vld [vmem:[%s5 + $0x3c] sm:$0xf]
  %v218 = vld [vmem:[%s6] sm:$0x1]
  %v220 = vlaneseq
  %v221 = vshrl.u32 %v220, 7
  %v222 = vsub.s32 0, %v221
  %v223 = vrot.slane %v218, %v222
  %v241 = vunpack.c.l.b16 %v202
  %v242 = vunpack.c.l.b16 %v203
  %v243 = vunpack.c.l.b16 %v204
  %v244 = vunpack.c.l.b16 %v205
  %v245 = vunpack.c.l.b16 %v206
  %v246 = vunpack.c.l.b16 %v207
  %v247 = vunpack.c.l.b16 %v208
  %v248 = vunpack.c.l.b16 %v209
  %v249 = vunpack.c.l.b16 %v210
  %v250 = vunpack.c.l.b16 %v211
  %v251 = vunpack.c.l.b16 %v212
  %v252 = vunpack.c.l.b16 %v213
  %v253 = vunpack.c.l.b16 %v214
  %v254 = vunpack.c.l.b16 %v215
  %v255 = vunpack.c.l.b16 %v216
  %v256 = vunpack.c.l.b16 %v217
  %v257 = vpack.c.b16 %v242, %v241
  %v258 = vpack.c.b16 %v244, %v243
  %v259 = vpack.c.b16 %v246, %v245
  %v260 = vpack.c.b16 %v248, %v247
  %v261 = vpack.c.b16 %v250, %v249
  %v262 = vpack.c.b16 %v252, %v251
  %v263 = vpack.c.b16 %v254, %v253
  %v264 = vpack.c.b16 %v256, %v255
  %273 = vmatprep.subr.bf16.mxu0 0
  %274 = vmatpush1.bf16.msra.mxu0 %v257
  %275 = vmatprep.subr.bf16.mxu0 0
  %276 = vmatpush1.bf16.msra.mxu0 %v258
  %277 = vmatprep.subr.bf16.mxu0 0
  %278 = vmatpush1.bf16.msra.mxu0 %v259
  %279 = vmatprep.subr.bf16.mxu0 0
  %280 = vmatpush1.bf16.msra.mxu0 %v260
  %281 = vmatprep.subr.bf16.mxu0 0
  %282 = vmatpush1.bf16.msra.mxu0 %v261
  %283 = vmatprep.subr.bf16.mxu0 0
  %284 = vmatpush1.bf16.msra.mxu0 %v262
  %285 = vmatprep.subr.bf16.mxu0 0
  %286 = vmatpush1.bf16.msra.mxu0 %v263
  %287 = vmatprep.subr.bf16.mxu0 0
  %288 = vmatpush1.bf16.msra.mxu0 %v264
  %289 = vmatprep.subr.bf16.mxu0 0
  %290 = vmatpush1.bf16.msra.mxu0 0
  %291 = vmatprep.subr.bf16.mxu0 0
  %292 = vmatpush1.bf16.msra.mxu0 0
  %293 = vmatprep.subr.bf16.mxu0 0
  %294 = vmatpush1.bf16.msra.mxu0 0
  %295 = vmatprep.subr.bf16.mxu0 0
  %296 = vmatpush1.bf16.msra.mxu0 0
  %297 = vmatprep.subr.bf16.mxu0 0
  %298 = vmatpush1.bf16.msra.mxu0 0
  %299 = vmatprep.subr.bf16.mxu0 0
  %300 = vmatpush1.bf16.msra.mxu0 0
  %301 = vmatprep.subr.bf16.mxu0 0
  %302 = vmatpush1.bf16.msra.mxu0 0
  %303 = vmatprep.subr.bf16.mxu0 0
  %304 = vmatpush1.bf16.msra.mxu0 0
  %305 = vmatprep.mubr.bf16.mxu0 0
  %306 = vmatmul.mubr.bf16.gmra.mrb[0].mxu0 %v201
  %v307 = vpop.f32.mrb[0].mxu0
  %v308 = vadd.f32 %v223, %v307
  %v309 = vpop.f32.mrb[0].mxu0
  %v310 = vpop.f32.mrb[0].mxu0
  %v311 = vpop.f32.mrb[0].mxu0
  %312 = vdwg.mxu0
  %313 = vst [vmem:[%s7] sm:$0xff] %v308
  // Predicated region
  $region30: #{qnetwork_forward.1} parent=0 // pred_check
    _
  $region31: #{qnetwork_forward.1} parent=0 // pred_check_branch
    %315 = sbr.rel (0) target = $region33
  $region32: #{qnetwork_forward.1} parent=0 // pred_region
    _
  $region33: #{qnetwork_forward.1} parent=0 // pred_fallthru
    _
  // Predicated region
  $region34: #{qnetwork_forward.1} parent=0 // pred_check
    _
  $region35: #{qnetwork_forward.1} parent=0 // pred_check_branch
    %317 = sbr.rel (0) target = $region37
  $region36: #{qnetwork_forward.1} parent=0 // pred_region
    _
  $region37: #{qnetwork_forward.1} parent=0 // pred_fallthru
    _

</llo_original>
